<compile_context>
chip_gen: v7x
topology: tpu7x:2x2x1
jax: 0.10.0
libtpu: 0.0.40
codegen_flags: <defaults>
</compile_context>

<pallas_src>
import functools

import jax
import jax.numpy as jnp
from jax.experimental import pallas as pl
from jax.experimental.pallas import tpu as pltpu

IN_FEATURES = 128
OUT_FEATURES = 1
LANES = 128  # TPU lane width; batch rows are grouped 128-at-a-time for lane-dense output


def _discriminator_kernel(x_ref, w_ref, b_ref, o_ref):
    # x_ref: (nbt, 128, 128)  one tile of nbt*128 batch rows, 128 features on the lane axis
    # w_ref: (1, 128)         fc weight row (resident across all grid steps)
    # b_ref: (1, 1)  in SMEM  fc bias scalar
    # o_ref: (nbt, 128)       lane-dense output: batch row n*128 + s  ->  o[n, s]
    x = x_ref[...].astype(jnp.float32)
    w = w_ref[...].astype(jnp.float32)            # (1, 128) broadcasts along the feature axis
    # 128->1 matvec as VPU multiply + XLU lane reduction (MXU with N=1 would waste the array).
    z = jnp.sum(x * w, axis=-1)                   # (nbt, 128): batch is now lane-dense
    z = z + b_ref[0, 0]                           # scalar bias from SMEM
    # sigmoid = 1 / (1 + exp(-z)): exp on EUP, approx reciprocal on EUP (off the VALU path)
    y = pl.reciprocal(1.0 + jnp.exp(-z), approx=True)
    o_ref[...] = y.astype(o_ref.dtype)


def _round_up(n, m):
    return ((n + m - 1) // m) * m


@functools.partial(jax.jit, static_argnames=("block_rows",))
def discriminator_forward(x, w, b, *, block_rows=1024):
    """x: (B, 128), w: (128, 1), b: (1, 1)  ->  (B, 1) float32 = sigmoid(x @ w + b)."""
    # block_rows multiple of 1024 keeps the output block's second-to-last dim a
    # multiple of 8 (8 * 128-row groups), satisfying the (8, 128) tiling rule.
    assert block_rows % 1024 == 0, "block_rows must be a multiple of 1024"
    B, F = x.shape
    assert F == IN_FEATURES

    # Pad the batch so it reshapes to (rows/128, 128, 128) and tiles evenly.
    rows = _round_up(max(B, 1), LANES)
    tb = min(block_rows, rows)                   # rows per grid step (multiple of 128)
    rows = _round_up(rows, tb)
    if rows != B:
        x = jnp.pad(x, ((0, rows - B), (0, 0)))  # zero rows -> sigmoid(bias), sliced off below

    nb_total = rows // LANES                     # 128-row groups overall
    nbt = tb // LANES                            # groups per tile: either the full dim or a mult of 8
    grid = (rows // tb,)

    x3 = x.reshape(nb_total, LANES, IN_FEATURES)        # contiguous reshape: no data movement
    w_row = w.reshape(1, IN_FEATURES).astype(jnp.float32)
    bias = b.reshape(1, 1).astype(jnp.float32)

    tile_bytes = tb * IN_FEATURES * jnp.dtype(x.dtype).itemsize
    vmem_limit = int(min(32 << 20, max(8 << 20, 6 * tile_bytes)))  # safe on v5e/v6e/v7x

    out = pl.pallas_call(
        _discriminator_kernel,
        out_shape=jax.ShapeDtypeStruct((nb_total, LANES), jnp.float32),
        grid=grid,
        in_specs=[
            pl.BlockSpec((nbt, LANES, IN_FEATURES), lambda i: (i, 0, 0)),   # streamed x tile
            pl.BlockSpec((1, IN_FEATURES), lambda i: (0, 0)),               # resident weight row
            pl.BlockSpec(memory_space=pltpu.MemorySpace.SMEM),              # scalar bias
        ],
        out_specs=pl.BlockSpec((nbt, LANES), lambda i: (i, 0)),             # lane-dense output
        compiler_params=pltpu.CompilerParams(
            dimension_semantics=("parallel",),
            vmem_limit_bytes=vmem_limit,
        ),
    )(x3, w_row, bias)

    return out.reshape(rows, OUT_FEATURES)[:B]


def init_params(key):
    """Deterministic nn.Linear(128, 1)-style init: U(-1/sqrt(128), 1/sqrt(128))."""
    kw, kb = jax.random.split(key)
    bound = 1.0 / jnp.sqrt(jnp.float32(IN_FEATURES))
    w = jax.random.uniform(
        kw, (IN_FEATURES, OUT_FEATURES), jnp.float32, minval=-bound, maxval=bound
    )
    b = jax.random.uniform(
        kb, (1, OUT_FEATURES), jnp.float32, minval=-bound, maxval=bound
    )
    return w, b


if __name__ == "__main__":
    key = jax.random.PRNGKey(0)
    k_x, k_x2, k_p = jax.random.split(key, 3)

    w, b = init_params(k_p)

    # Small case (single tile; batch padded up to one 128-row lane group).
    batch = 8
    x = jax.random.normal(k_x, (batch, IN_FEATURES), dtype=jnp.float32)
    out = jax.block_until_ready(discriminator_forward(x, w, b))
    ref = jax.nn.sigmoid(x @ w + b)
    assert out.shape == (batch, OUT_FEATURES)
    assert jnp.allclose(out, ref, atol=2e-3, rtol=2e-3), float(jnp.max(jnp.abs(out - ref)))

    # Multi-tile case: exercises the batch grid, pipelining and the padded final tile.
    batch2 = 2176  # 17 * 128 rows -> padded to 3 * 1024 rows, grid = (3,)
    x2 = jax.random.normal(k_x2, (batch2, IN_FEATURES), dtype=jnp.float32)
    out2 = jax.block_until_ready(discriminator_forward(x2, w, b))
    ref2 = jax.nn.sigmoid(x2 @ w + b)
    assert out2.shape == (batch2, OUT_FEATURES)
    assert jnp.allclose(out2, ref2, atol=2e-3, rtol=2e-3), float(jnp.max(jnp.abs(out2 - ref2)))

    print("KERNEL_OK")
</pallas_src>

<mosaic_0001>
module attributes {stable_mosaic.version = 11 : i64} {
  func.func @_discriminator_kernel(%arg0: i32, %arg1: memref<1x128x128xf32, #tpu.memory_space<vmem>>, %arg2: memref<1x128xf32, #tpu.memory_space<vmem>>, %arg3: memref<1x1xf32, #tpu.memory_space<smem>>, %arg4: memref<1x128xf32, #tpu.memory_space<vmem>>) attributes {dimension_semantics = [#tpu.dimension_semantics<parallel>], iteration_bounds = array<i64: 1>, scalar_prefetch = 0 : i64, scratch_operands = 0 : i64, tpu.core_type = #tpu.core_type<tc>, window_params = [{transform_indices = @transform_0, window_bounds = array<i64: 1, 128, 128>}, {pipeline_mode = #tpu.pipeline_mode<synchronous>, transform_indices = @transform_1, window_bounds = array<i64: 1, 128>}, {transform_indices = @transform_2, window_bounds = array<i64: 1, 1>}, {transform_indices = @transform_3, window_bounds = array<i64: 1, 128>}]} {
    %c0 = arith.constant 0 : index
    %c0_0 = arith.constant 0 : index
    %c0_1 = arith.constant 0 : index
    %0 = vector.load %arg1[%c0, %c0_0, %c0_1] : memref<1x128x128xf32, #tpu.memory_space<vmem>>, vector<1x128x128xf32>
    %c0_2 = arith.constant 0 : index
    %c0_3 = arith.constant 0 : index
    %1 = vector.load %arg2[%c0_2, %c0_3] : memref<1x128xf32, #tpu.memory_space<vmem>>, vector<1x128xf32>
    %2 = vector.shape_cast %1 : vector<1x128xf32> to vector<1x1x128xf32>
    %3 = vector.broadcast %2 : vector<1x1x128xf32> to vector<1x128x128xf32>
    %4 = arith.mulf %0, %3 : vector<1x128x128xf32>
    %cst = arith.constant dense<0.000000e+00> : vector<1x128xf32>
    %5 = vector.multi_reduction <add>, %4, %cst [2] : vector<1x128x128xf32> to vector<1x128xf32>
    %c0_4 = arith.constant 0 : index
    %c0_5 = arith.constant 0 : index
    %6 = memref.load %arg3[%c0_4, %c0_5] : memref<1x1xf32, #tpu.memory_space<smem>>
    %7 = vector.broadcast %6 : f32 to vector<1x128xf32>
    %8 = arith.addf %5, %7 : vector<1x128xf32>
    %cst_6 = arith.constant 0.000000e+00 : f32
    %9 = vector.broadcast %cst_6 : f32 to vector<1x128xf32>
    %10 = arith.subf %9, %8 : vector<1x128xf32>
    %11 = math.exp %10 : vector<1x128xf32>
    %cst_7 = arith.constant 1.000000e+00 : f32
    %12 = vector.broadcast %cst_7 : f32 to vector<1x128xf32>
    %13 = arith.addf %12, %11 : vector<1x128xf32>
    %14 = tpu.reciprocal %13 {approx = true} : vector<1x128xf32> -> vector<1x128xf32>
    %c0_8 = arith.constant 0 : index
    %c0_9 = arith.constant 0 : index
    %15 = vector.load %arg4[%c0_8, %c0_9] : memref<1x128xf32, #tpu.memory_space<vmem>>, vector<1x128xf32>
    tpu.vector_store %arg4[%c0_8, %c0_9], %14 {strides = array<i32>} : memref<1x128xf32, #tpu.memory_space<vmem>>, vector<1x128xf32>,
    return
  }
  func.func @transform_0(%arg0: i32) -> (i32, i32, i32) {
    %c0_i32 = arith.constant 0 : i32
    %c0_i32_0 = arith.constant 0 : i32
    %c0_i32_1 = arith.constant 0 : i32
    return %arg0, %c0_i32, %c0_i32_0 : i32, i32, i32
  }
  func.func @transform_1(%arg0: i32) -> (i32, i32) {
    %c0_i32 = arith.constant 0 : i32
    %c0_i32_0 = arith.constant 0 : i32
    %c0_i32_1 = arith.constant 0 : i32
    return %c0_i32, %c0_i32_0 : i32, i32
  }
  func.func @transform_2(%arg0: i32) -> (i32, i32) {
    %c0_i32 = arith.constant 0 : i32
    %c0_i32_0 = arith.constant 0 : i32
    %c0_i32_1 = arith.constant 0 : i32
    return %c0_i32, %c0_i32_0 : i32, i32
  }
  func.func @transform_3(%arg0: i32) -> (i32, i32) {
    %c0_i32 = arith.constant 0 : i32
    %c0_i32_0 = arith.constant 0 : i32
    return %arg0, %c0_i32 : i32, i32
  }
}

</mosaic_0001>

<llo_original>
// kernel: discriminator_forward.1
$region0: #{discriminator_forward.1}
  #allocation0 [shape = 'u32[]', space=smem, size = 0x4, offset = 0x4, fixed_abs, tag = 'smem constant byte address 0x4 - core index']
  #allocation1 [shape = 'u32[144,128]{1,0:T(1,128)}', space=vmem, size = 0x12000, scoped, tag = 'internal scratch']
  #allocation2 [shape = 'f32[1,1]{1,0:T(1,128)S(6)}', space=smem, size = 0x200, scoped, tag = 'scoped memory for discriminator_forward.1']
  %s0 = inlined_call_operand.vmem [shape: f32[1,128,128], index: 0, kind: input, shape index: {}]
  %s1 = inlined_call_operand.vmem [shape: f32[1,128], index: 1, kind: input, shape index: {}]
  %s2 = inlined_call_operand.<no memory space> [shape: f32[1,1], index: 2, kind: input, shape index: {}]
  %s3 = inlined_call_operand.vmem [shape: f32[1,128], index: 3, kind: output, shape index: {}]
  %s4 = sld [smem:[#allocation0]]
  $region22: #{discriminator_forward.1} parent=0
    _
  %s6 = ssub.s32 1, %s4
  %s7 = scalar_select 0, %s6, %s4
  %8 = sst [smem:[#allocation2]] %s2
  // Predicated region
  $region2: #{discriminator_forward.1} parent=0 // pred_check
    _
  $region3: #{discriminator_forward.1} parent=0 // pred_check_branch
    %10 = sbr.rel (0) target = $region5
  $region4: #{discriminator_forward.1} parent=0 // pred_region
    _
  $region5: #{discriminator_forward.1} parent=0 // pred_fallthru
    _
  // Predicated region
  $region6: #{discriminator_forward.1} parent=0 // pred_check
    _
  $region7: #{discriminator_forward.1} parent=0 // pred_check_branch
    %12 = sbr.rel (0) target = $region9
  $region8: #{discriminator_forward.1} parent=0 // pred_region
    _
  $region9: #{discriminator_forward.1} parent=0 // pred_fallthru
    _
  // Predicated region
  $region10: #{discriminator_forward.1} parent=0 // pred_check
    _
  $region11: #{discriminator_forward.1} parent=0 // pred_check_branch
    %14 = sbr.rel (0) target = $region13
  $region12: #{discriminator_forward.1} parent=0 // pred_region
    _
  $region13: #{discriminator_forward.1} parent=0 // pred_fallthru
    _
  %v15 = vld [vmem:[%s0] sm:$0xff]
  %v16 = vld [vmem:[%s0 + $0x8] sm:$0xff]
  %v17 = vld [vmem:[%s0 + $0x10] sm:$0xff]
  %v18 = vld [vmem:[%s0 + $0x18] sm:$0xff]
  %v19 = vld [vmem:[%s0 + $0x20] sm:$0xff]
  %v20 = vld [vmem:[%s0 + $0x28] sm:$0xff]
  %v21 = vld [vmem:[%s0 + $0x30] sm:$0xff]
  %v22 = vld [vmem:[%s0 + $0x38] sm:$0xff]
  %v23 = vld [vmem:[%s0 + $0x40] sm:$0xff]
  %v24 = vld [vmem:[%s0 + $0x48] sm:$0xff]
  %v25 = vld [vmem:[%s0 + $0x50] sm:$0xff]
  %v26 = vld [vmem:[%s0 + $0x58] sm:$0xff]
  %v27 = vld [vmem:[%s0 + $0x60] sm:$0xff]
  %v28 = vld [vmem:[%s0 + $0x68] sm:$0xff]
  %v29 = vld [vmem:[%s0 + $0x70] sm:$0xff]
  %v30 = vld [vmem:[%s0 + $0x78] sm:$0xff]
  %v31 = vld [vmem:[%s1] sm:$0x1]
  %v33 = vlaneseq
  %v34 = vshrl.u32 %v33, 7
  %v35 = vsub.s32 0, %v34
  %v36 = vrot.slane %v31, %v35
  %v38 = vmul.f32 %v15, %v36
  %v39 = vmul.f32 %v16, %v36
  %v40 = vmul.f32 %v17, %v36
  %v41 = vmul.f32 %v18, %v36
  %v42 = vmul.f32 %v19, %v36
  %v43 = vmul.f32 %v20, %v36
  %v44 = vmul.f32 %v21, %v36
  %v45 = vmul.f32 %v22, %v36
  %v46 = vmul.f32 %v23, %v36
  %v47 = vmul.f32 %v24, %v36
  %v48 = vmul.f32 %v25, %v36
  %v49 = vmul.f32 %v26, %v36
  %v50 = vmul.f32 %v27, %v36
  %v51 = vmul.f32 %v28, %v36
  %v52 = vmul.f32 %v29, %v36
  %v53 = vmul.f32 %v30, %v36
  %54 = vadd.xlane.f32.xlu0 %v38
  %v55 = vpop.xlane.xlu0 %54
  %56 = vadd.xlane.f32.xlu0 %v39
  %v57 = vpop.xlane.xlu0 %56
  %58 = vadd.xlane.f32.xlu0 %v40
  %v59 = vpop.xlane.xlu0 %58
  %60 = vadd.xlane.f32.xlu0 %v41
  %v61 = vpop.xlane.xlu0 %60
  %62 = vadd.xlane.f32.xlu0 %v42
  %v63 = vpop.xlane.xlu0 %62
  %64 = vadd.xlane.f32.xlu0 %v43
  %v65 = vpop.xlane.xlu0 %64
  %66 = vadd.xlane.f32.xlu0 %v44
  %v67 = vpop.xlane.xlu0 %66
  %68 = vadd.xlane.f32.xlu0 %v45
  %v69 = vpop.xlane.xlu0 %68
  %70 = vadd.xlane.f32.xlu0 %v46
  %v71 = vpop.xlane.xlu0 %70
  %72 = vadd.xlane.f32.xlu0 %v47
  %v73 = vpop.xlane.xlu0 %72
  %74 = vadd.xlane.f32.xlu0 %v48
  %v75 = vpop.xlane.xlu0 %74
  %76 = vadd.xlane.f32.xlu0 %v49
  %v77 = vpop.xlane.xlu0 %76
  %78 = vadd.xlane.f32.xlu0 %v50
  %v79 = vpop.xlane.xlu0 %78
  %80 = vadd.xlane.f32.xlu0 %v51
  %v81 = vpop.xlane.xlu0 %80
  %82 = vadd.xlane.f32.xlu0 %v52
  %v83 = vpop.xlane.xlu0 %82
  %84 = vadd.xlane.f32.xlu0 %v53
  %v85 = vpop.xlane.xlu0 %84
  %s86 = sld [smem:[#allocation2]]
  %v87 = vstv %s86
  %v88 = vadd.f32 %v55, %v87
  %v89 = vadd.f32 %v57, %v87
  %v90 = vadd.f32 %v59, %v87
  %v91 = vadd.f32 %v61, %v87
  %v92 = vadd.f32 %v63, %v87
  %v93 = vadd.f32 %v65, %v87
  %v94 = vadd.f32 %v67, %v87
  %v95 = vadd.f32 %v69, %v87
  %v96 = vadd.f32 %v71, %v87
  %v97 = vadd.f32 %v73, %v87
  %v98 = vadd.f32 %v75, %v87
  %v99 = vadd.f32 %v77, %v87
  %v100 = vadd.f32 %v79, %v87
  %v101 = vadd.f32 %v81, %v87
  %v102 = vadd.f32 %v83, %v87
  %v103 = vadd.f32 %v85, %v87
  %v104 = vsub.f32 0.0, %v88
  %v105 = vsub.f32 0.0, %v89
  %v106 = vsub.f32 0.0, %v90
  %v107 = vsub.f32 0.0, %v91
  %v108 = vsub.f32 0.0, %v92
  %v109 = vsub.f32 0.0, %v93
  %v110 = vsub.f32 0.0, %v94
  %v111 = vsub.f32 0.0, %v95
  %v112 = vsub.f32 0.0, %v96
  %v113 = vsub.f32 0.0, %v97
  %v114 = vsub.f32 0.0, %v98
  %v115 = vsub.f32 0.0, %v99
  %v116 = vsub.f32 0.0, %v100
  %v117 = vsub.f32 0.0, %v101
  %v118 = vsub.f32 0.0, %v102
  %v119 = vsub.f32 0.0, %v103
  %v120 = vmul.f32 %v104, 1.442695
  %v121 = vpow.pop %v120
  %v122 = vmul.f32 %v105, 1.442695
  %v123 = vpow.pop %v122
  %v124 = vmul.f32 %v106, 1.442695
  %v125 = vpow.pop %v124
  %v126 = vmul.f32 %v107, 1.442695
  %v127 = vpow.pop %v126
  %v128 = vmul.f32 %v108, 1.442695
  %v129 = vpow.pop %v128
  %v130 = vmul.f32 %v109, 1.442695
  %v131 = vpow.pop %v130
  %v132 = vmul.f32 %v110, 1.442695
  %v133 = vpow.pop %v132
  %v134 = vmul.f32 %v111, 1.442695
  %v135 = vpow.pop %v134
  %v136 = vmul.f32 %v112, 1.442695
  %v137 = vpow.pop %v136
  %v138 = vmul.f32 %v113, 1.442695
  %v139 = vpow.pop %v138
  %v140 = vmul.f32 %v114, 1.442695
  %v141 = vpow.pop %v140
  %v142 = vmul.f32 %v115, 1.442695
  %v143 = vpow.pop %v142
  %v144 = vmul.f32 %v116, 1.442695
  %v145 = vpow.pop %v144
  %v146 = vmul.f32 %v117, 1.442695
  %v147 = vpow.pop %v146
  %v148 = vmul.f32 %v118, 1.442695
  %v149 = vpow.pop %v148
  %v150 = vmul.f32 %v119, 1.442695
  %v151 = vpow.pop %v150
  %v152 = vadd.f32 %v121, 1.0
  %v153 = vadd.f32 %v123, 1.0
  %v154 = vadd.f32 %v125, 1.0
  %v155 = vadd.f32 %v127, 1.0
  %v156 = vadd.f32 %v129, 1.0
  %v157 = vadd.f32 %v131, 1.0
  %v158 = vadd.f32 %v133, 1.0
  %v159 = vadd.f32 %v135, 1.0
  %v160 = vadd.f32 %v137, 1.0
  %v161 = vadd.f32 %v139, 1.0
  %v162 = vadd.f32 %v141, 1.0
  %v163 = vadd.f32 %v143, 1.0
  %v164 = vadd.f32 %v145, 1.0
  %v165 = vadd.f32 %v147, 1.0
  %v166 = vadd.f32 %v149, 1.0
  %v167 = vadd.f32 %v151, 1.0
  %v168 = vrcp.pop %v152
  %v169 = vrcp.pop %v153
  %v170 = vrcp.pop %v154
  %v171 = vrcp.pop %v155
  %v172 = vrcp.pop %v156
  %v173 = vrcp.pop %v157
  %v174 = vrcp.pop %v158
  %v175 = vrcp.pop %v159
  %v176 = vrcp.pop %v160
  %v177 = vrcp.pop %v161
  %v178 = vrcp.pop %v162
  %v179 = vrcp.pop %v163
  %v180 = vrcp.pop %v164
  %v181 = vrcp.pop %v165
  %v182 = vrcp.pop %v166
  %v183 = vrcp.pop %v167
  %v200 = vlaneseq
  %v201 = vand.u32 %v200, 127
  %v202 = vlaneseq
  %v203 = vshrl.u32 %v202, 7
  %v204 = vsub.s32 %v201, %v203
  %v205 = vrot.slane %v168, %v204
  %v206 = vadd.s32 %v201, 4294967288
  %v207 = vlaneseq
  %v208 = vshrl.u32 %v207, 7
  %v209 = vsub.s32 %v206, %v208
  %v210 = vrot.slane %v169, %v209
  %vm211 = vcmask 130112
  %v212 = vsel %vm211, %v210, %v205
  %v213 = vadd.s32 %v201, 4294967280
  %v214 = vlaneseq
  %v215 = vshrl.u32 %v214, 7
  %v216 = vsub.s32 %v213, %v215
  %v217 = vrot.slane %v170, %v216
  %vm218 = vcmask 195712
  %v219 = vsel %vm218, %v217, %v212
  %v220 = vadd.s32 %v201, 4294967272
  %v221 = vlaneseq
  %v222 = vshrl.u32 %v221, 7
  %v223 = vsub.s32 %v220, %v222
  %v224 = vrot.slane %v171, %v223
  %vm225 = vcmask 261312
  %v226 = vsel %vm225, %v224, %v219
  %v227 = vadd.s32 %v201, 4294967264
  %v228 = vlaneseq
  %v229 = vshrl.u32 %v228, 7
  %v230 = vsub.s32 %v227, %v229
  %v231 = vrot.slane %v172, %v230
  %vm232 = vcmask 326912
  %v233 = vsel %vm232, %v231, %v226
  %v234 = vadd.s32 %v201, 4294967256
  %v235 = vlaneseq
  %v236 = vshrl.u32 %v235, 7
  %v237 = vsub.s32 %v234, %v236
  %v238 = vrot.slane %v173, %v237
  %vm239 = vcmask 392512
  %v240 = vsel %vm239, %v238, %v233
  %v241 = vadd.s32 %v201, 4294967248
  %v242 = vlaneseq
  %v243 = vshrl.u32 %v242, 7
  %v244 = vsub.s32 %v241, %v243
  %v245 = vrot.slane %v174, %v244
  %vm246 = vcmask 458112
  %v247 = vsel %vm246, %v245, %v240
  %v248 = vadd.s32 %v201, 4294967240
  %v249 = vlaneseq
  %v250 = vshrl.u32 %v249, 7
  %v251 = vsub.s32 %v248, %v250
  %v252 = vrot.slane %v175, %v251
  %vm253 = vcmask 523712
  %v254 = vsel %vm253, %v252, %v247
  %v255 = vadd.s32 %v201, 4294967232
  %v256 = vlaneseq
  %v257 = vshrl.u32 %v256, 7
  %v258 = vsub.s32 %v255, %v257
  %v259 = vrot.slane %v176, %v258
  %vm260 = vcmask 589312
  %v261 = vsel %vm260, %v259, %v254
  %v262 = vadd.s32 %v201, 4294967224
  %v263 = vlaneseq
  %v264 = vshrl.u32 %v263, 7
  %v265 = vsub.s32 %v262, %v264
  %v266 = vrot.slane %v177, %v265
  %vm267 = vcmask 654912
  %v268 = vsel %vm267, %v266, %v261
  %v269 = vadd.s32 %v201, 4294967216
  %v270 = vlaneseq
  %v271 = vshrl.u32 %v270, 7
  %v272 = vsub.s32 %v269, %v271
  %v273 = vrot.slane %v178, %v272
  %vm274 = vcmask 720512
  %v275 = vsel %vm274, %v273, %v268
  %v276 = vadd.s32 %v201, 4294967208
  %v277 = vlaneseq
  %v278 = vshrl.u32 %v277, 7
  %v279 = vsub.s32 %v276, %v278
  %v280 = vrot.slane %v179, %v279
  %vm281 = vcmask 786112
  %v282 = vsel %vm281, %v280, %v275
  %v283 = vadd.s32 %v201, 4294967200
  %v284 = vlaneseq
  %v285 = vshrl.u32 %v284, 7
  %v286 = vsub.s32 %v283, %v285
  %v287 = vrot.slane %v180, %v286
  %vm288 = vcmask 851712
  %v289 = vsel %vm288, %v287, %v282
  %v290 = vadd.s32 %v201, 4294967192
  %v291 = vlaneseq
  %v292 = vshrl.u32 %v291, 7
  %v293 = vsub.s32 %v290, %v292
  %v294 = vrot.slane %v181, %v293
  %vm295 = vcmask 917312
  %v296 = vsel %vm295, %v294, %v289
  %v297 = vadd.s32 %v201, 4294967184
  %v298 = vlaneseq
  %v299 = vshrl.u32 %v298, 7
  %v300 = vsub.s32 %v297, %v299
  %v301 = vrot.slane %v182, %v300
  %vm302 = vcmask 982912
  %v303 = vsel %vm302, %v301, %v296
  %v304 = vadd.s32 %v201, 4294967176
  %v305 = vlaneseq
  %v306 = vshrl.u32 %v305, 7
  %v307 = vsub.s32 %v304, %v306
  %v308 = vrot.slane %v183, %v307
  %vm309 = vcmask 1048512
  %v310 = vsel %vm309, %v308, %v303
  %312 = vst [vmem:[%s3] sm:$0x1] %v310
  // Predicated region
  $region14: #{discriminator_forward.1} parent=0 // pred_check
    _
  $region15: #{discriminator_forward.1} parent=0 // pred_check_branch
    %314 = sbr.rel (0) target = $region17
  $region16: #{discriminator_forward.1} parent=0 // pred_region
    _
  $region17: #{discriminator_forward.1} parent=0 // pred_fallthru
    _
  // Predicated region
  $region18: #{discriminator_forward.1} parent=0 // pred_check
    _
  $region19: #{discriminator_forward.1} parent=0 // pred_check_branch
    %316 = sbr.rel (0) target = $region21
  $region20: #{discriminator_forward.1} parent=0 // pred_region
    _
  $region21: #{discriminator_forward.1} parent=0 // pred_fallthru
    _

</llo_original>
